<compile_context>
chip_gen: v7x
topology: tpu7x:2x2x1
jax: 0.10.0
libtpu: 0.0.40
codegen_flags: <defaults>
</compile_context>

<pallas_src>
import jax
import jax.numpy as jnp
from jax.experimental import pallas as pl
from jax.experimental.pallas import tpu as pltpu


def _round_up(x: int, m: int) -> int:
    return (x + m - 1) // m * m


# ----------------------------------------------------------------------------
# Kernels
# ----------------------------------------------------------------------------
def _packed_kernel(x_ref, wg_ref, b_ref, o_ref):
    """Lane-dense path (E divides 128).

    x_ref:  (T, G)     G = 128 // E scalars per packed output row
    wg_ref: (G, 128)   wg[g, c] = W[c % E] if c // E == g else 0
    b_ref:  (1, 128)   bias tiled G times
    o_ref:  (T, 128)
    """
    x = x_ref[...].astype(jnp.float32)          # (T, G)
    wg = wg_ref[...]                            # (G, 128), loaded once
    G = x.shape[1]
    acc = x[:, 0:1] * wg[0:1, :]                # broadcast FMA, full 128 lanes
    for g in range(1, G):                       # unrolled at trace time
        acc = acc + x[:, g:g + 1] * wg[g:g + 1, :]
    o_ref[...] = (acc + b_ref[...]).astype(o_ref.dtype)


def _simple_kernel(x_ref, w_ref, b_ref, o_ref):
    """General path (E >= 128 or E does not divide 128).

    x_ref: (T, 1), w_ref/b_ref: (1, E), o_ref: (T, E)
    """
    x = x_ref[...].astype(jnp.float32)          # (T, 1)
    o_ref[...] = (x * w_ref[...] + b_ref[...]).astype(o_ref.dtype)


# ----------------------------------------------------------------------------
# Wrapper
# ----------------------------------------------------------------------------
def mask_embed(x, weight, bias, *, tile_rows=1024, out_dtype=None,
               vmem_limit_bytes=None):
    """MaskEmbed forward.

    Args:
      x:      (B, 1, L) float   -- NCL layout, matching nn.Conv1d input.
      weight: (E, 1, 1) float   -- Conv1d weight.
      bias:   (E,)      float   -- Conv1d bias.
      tile_rows: rows per grid step (packed rows for the lane-dense path).
      out_dtype: output dtype (default: x.dtype). Compute is always f32.
      vmem_limit_bytes: optional Mosaic scoped-VMEM override for very large tiles.
    Returns:
      (B, L, E)
    """
    B, C, L = x.shape
    assert C == 1
    E = int(weight.shape[0])
    out_dtype = out_dtype or x.dtype

    rows = B * L
    w1 = weight.reshape(E).astype(jnp.float32)
    b1 = bias.reshape(E).astype(jnp.float32)

    cparams = pltpu.CompilerParams(
        dimension_semantics=("parallel",),
        vmem_limit_bytes=vmem_limit_bytes,
    )

    if E < 128 and 128 % E == 0:
        # ---------------- lane-dense packed path ----------------
        G = 128 // E                               # logical rows per packed row
        p_raw = pl.cdiv(rows, G)                   # packed rows needed
        tile = _round_up(min(tile_rows, _round_up(p_raw, 8)), 8)
        P = _round_up(p_raw, tile)                 # padded packed rows
        rows_pad = P * G

        x_flat = x.reshape(rows).astype(jnp.float32)
        x_flat = jnp.pad(x_flat, (0, rows_pad - rows))
        x_packed = x_flat.reshape(P, G)

        # Group-masked weight rows and tiled bias (built once, on host/XLA side).
        w_tiled = jnp.tile(w1, (G,))                               # (128,)
        group_id = jnp.arange(128, dtype=jnp.int32) // E           # (128,)
        w_groups = jnp.where(
            group_id[None, :] == jnp.arange(G, dtype=jnp.int32)[:, None],
            w_tiled[None, :], jnp.float32(0.0))                    # (G, 128)
        b_tiled = jnp.tile(b1, (G,)).reshape(1, 128)               # (1, 128)

        grid = (P // tile,)
        out = pl.pallas_call(
            _packed_kernel,
            out_shape=jax.ShapeDtypeStruct((P, 128), out_dtype),
            grid_spec=pltpu.PrefetchScalarGridSpec(
                num_scalar_prefetch=0,
                grid=grid,
                in_specs=[
                    pl.BlockSpec((tile, G), lambda i: (i, 0)),
                    pl.BlockSpec((G, 128), lambda i: (0, 0)),   # DMA'd once
                    pl.BlockSpec((1, 128), lambda i: (0, 0)),   # DMA'd once
                ],
                out_specs=pl.BlockSpec((tile, 128), lambda i: (i, 0)),
            ),
            compiler_params=cparams,
        )(x_packed, w_groups, b_tiled)

        # (P, 128) row-major is byte-identical to (P*G, E) row-major.
        y = out.reshape(P * G, E)[:rows]
        return y.reshape(B, L, E)

    # ---------------- general path (E >= 128 or E ∤ 128) ----------------
    tile = _round_up(min(tile_rows, _round_up(rows, 8)), 8)
    R = _round_up(rows, tile)
    x_flat = x.reshape(rows, 1).astype(jnp.float32)
    x_flat = jnp.pad(x_flat, ((0, R - rows), (0, 0)))
    w2d = w1.reshape(1, E)
    b2d = b1.reshape(1, E)

    grid = (R // tile,)
    out = pl.pallas_call(
        _simple_kernel,
        out_shape=jax.ShapeDtypeStruct((R, E), out_dtype),
        grid_spec=pltpu.PrefetchScalarGridSpec(
            num_scalar_prefetch=0,
            grid=grid,
            in_specs=[
                pl.BlockSpec((tile, 1), lambda i: (i, 0)),
                pl.BlockSpec((1, E), lambda i: (0, 0)),
                pl.BlockSpec((1, E), lambda i: (0, 0)),
            ],
            out_specs=pl.BlockSpec((tile, E), lambda i: (i, 0)),
        ),
        compiler_params=cparams,
    )(x_flat, w2d, b2d)

    # norm_layer is None in the reference config -> nn.Identity()
    return out[:rows].reshape(B, L, E)


if __name__ == "__main__":
    # Small shapes consistent with the module: rec_len (L) = 8, embed_dim = 32, B = 2
    B, L, E = 2, 8, 32

    key = jax.random.PRNGKey(0)
    kx, kw, kb = jax.random.split(key, 3)

    x = jax.random.normal(kx, (B, 1, L), dtype=jnp.float32)
    # Deterministic synthetic Conv1d parameters (shapes match nn.Conv1d(1, E, 1)).
    weight = jax.random.normal(kw, (E, 1, 1), dtype=jnp.float32) * 0.1
    bias = jax.random.normal(kb, (E,), dtype=jnp.float32) * 0.1

    y = mask_embed(x, weight, bias)
    y = jax.block_until_ready(y)

    # Reference check in plain JAX (same math as PyTorch conv1d k=1 + transpose).
    ref = x[:, 0, :, None] * weight.reshape(1, 1, E) + bias.reshape(1, 1, E)
    assert y.shape == (B, L, E)
    assert jnp.allclose(y, ref, atol=1e-6, rtol=1e-6)

    # Also exercise the general (E >= 128) path once to keep it tested.
    E2 = 128
    w2 = jax.random.normal(kw, (E2, 1, 1), dtype=jnp.float32) * 0.1
    b2 = jax.random.normal(kb, (E2,), dtype=jnp.float32) * 0.1
    y2 = jax.block_until_ready(mask_embed(x, w2, b2))
    ref2 = x[:, 0, :, None] * w2.reshape(1, 1, E2) + b2.reshape(1, 1, E2)
    assert jnp.allclose(y2, ref2, atol=1e-6, rtol=1e-6)

    print("KERNEL_OK")
</pallas_src>

<mosaic_0001>
module attributes {stable_mosaic.version = 11 : i64} {
  func.func @_packed_kernel(%arg0: i32, %arg1: memref<8x4xf32, #tpu.memory_space<vmem>>, %arg2: memref<4x128xf32, #tpu.memory_space<vmem>>, %arg3: memref<1x128xf32, #tpu.memory_space<vmem>>, %arg4: memref<8x128xf32, #tpu.memory_space<vmem>>) attributes {dimension_semantics = [#tpu.dimension_semantics<parallel>], iteration_bounds = array<i64: 1>, scalar_prefetch = 0 : i64, scratch_operands = 0 : i64, tpu.core_type = #tpu.core_type<tc>, window_params = [{transform_indices = @transform_0, window_bounds = array<i64: 8, 4>}, {pipeline_mode = #tpu.pipeline_mode<synchronous>, transform_indices = @transform_1, window_bounds = array<i64: 4, 128>}, {pipeline_mode = #tpu.pipeline_mode<synchronous>, transform_indices = @transform_2, window_bounds = array<i64: 1, 128>}, {transform_indices = @transform_3, window_bounds = array<i64: 8, 128>}]} {
    %c0 = arith.constant 0 : index
    %c0_0 = arith.constant 0 : index
    %0 = vector.load %arg1[%c0, %c0_0] : memref<8x4xf32, #tpu.memory_space<vmem>>, vector<8x4xf32>
    %c0_1 = arith.constant 0 : index
    %c0_2 = arith.constant 0 : index
    %1 = vector.load %arg2[%c0_1, %c0_2] : memref<4x128xf32, #tpu.memory_space<vmem>>, vector<4x128xf32>
    %2 = vector.extract_strided_slice %0 {offsets = [0, 0], sizes = [8, 1], strides = [1, 1]} : vector<8x4xf32> to vector<8x1xf32>
    %3 = vector.extract_strided_slice %1 {offsets = [0, 0], sizes = [1, 128], strides = [1, 1]} : vector<4x128xf32> to vector<1x128xf32>
    %4 = vector.broadcast %2 : vector<8x1xf32> to vector<8x128xf32>
    %5 = vector.broadcast %3 : vector<1x128xf32> to vector<8x128xf32>
    %6 = arith.mulf %4, %5 : vector<8x128xf32>
    %7 = vector.extract_strided_slice %0 {offsets = [0, 1], sizes = [8, 1], strides = [1, 1]} : vector<8x4xf32> to vector<8x1xf32>
    %8 = vector.extract_strided_slice %1 {offsets = [1, 0], sizes = [1, 128], strides = [1, 1]} : vector<4x128xf32> to vector<1x128xf32>
    %9 = vector.broadcast %7 : vector<8x1xf32> to vector<8x128xf32>
    %10 = vector.broadcast %8 : vector<1x128xf32> to vector<8x128xf32>
    %11 = arith.mulf %9, %10 : vector<8x128xf32>
    %12 = arith.addf %6, %11 : vector<8x128xf32>
    %13 = vector.extract_strided_slice %0 {offsets = [0, 2], sizes = [8, 1], strides = [1, 1]} : vector<8x4xf32> to vector<8x1xf32>
    %14 = vector.extract_strided_slice %1 {offsets = [2, 0], sizes = [1, 128], strides = [1, 1]} : vector<4x128xf32> to vector<1x128xf32>
    %15 = vector.broadcast %13 : vector<8x1xf32> to vector<8x128xf32>
    %16 = vector.broadcast %14 : vector<1x128xf32> to vector<8x128xf32>
    %17 = arith.mulf %15, %16 : vector<8x128xf32>
    %18 = arith.addf %12, %17 : vector<8x128xf32>
    %19 = vector.extract_strided_slice %0 {offsets = [0, 3], sizes = [8, 1], strides = [1, 1]} : vector<8x4xf32> to vector<8x1xf32>
    %20 = vector.extract_strided_slice %1 {offsets = [3, 0], sizes = [1, 128], strides = [1, 1]} : vector<4x128xf32> to vector<1x128xf32>
    %21 = vector.broadcast %19 : vector<8x1xf32> to vector<8x128xf32>
    %22 = vector.broadcast %20 : vector<1x128xf32> to vector<8x128xf32>
    %23 = arith.mulf %21, %22 : vector<8x128xf32>
    %24 = arith.addf %18, %23 : vector<8x128xf32>
    %c0_3 = arith.constant 0 : index
    %c0_4 = arith.constant 0 : index
    %25 = vector.load %arg3[%c0_3, %c0_4] : memref<1x128xf32, #tpu.memory_space<vmem>>, vector<1x128xf32>
    %26 = vector.broadcast %25 : vector<1x128xf32> to vector<8x128xf32>
    %27 = arith.addf %24, %26 : vector<8x128xf32>
    %c0_5 = arith.constant 0 : index
    %c0_6 = arith.constant 0 : index
    %28 = vector.load %arg4[%c0_5, %c0_6] : memref<8x128xf32, #tpu.memory_space<vmem>>, vector<8x128xf32>
    tpu.vector_store %arg4[%c0_5, %c0_6], %27 {strides = array<i32>} : memref<8x128xf32, #tpu.memory_space<vmem>>, vector<8x128xf32>,
    return
  }
  func.func @transform_0(%arg0: i32) -> (i32, i32) {
    %c0_i32 = arith.constant 0 : i32
    %c0_i32_0 = arith.constant 0 : i32
    return %arg0, %c0_i32 : i32, i32
  }
  func.func @transform_1(%arg0: i32) -> (i32, i32) {
    %c0_i32 = arith.constant 0 : i32
    %c0_i32_0 = arith.constant 0 : i32
    %c0_i32_1 = arith.constant 0 : i32
    return %c0_i32, %c0_i32_0 : i32, i32
  }
  func.func @transform_2(%arg0: i32) -> (i32, i32) {
    %c0_i32 = arith.constant 0 : i32
    %c0_i32_0 = arith.constant 0 : i32
    %c0_i32_1 = arith.constant 0 : i32
    return %c0_i32, %c0_i32_0 : i32, i32
  }
  func.func @transform_3(%arg0: i32) -> (i32, i32) {
    %c0_i32 = arith.constant 0 : i32
    %c0_i32_0 = arith.constant 0 : i32
    return %arg0, %c0_i32 : i32, i32
  }
}

</mosaic_0001>

<llo_original>
// kernel: tpu_custom_call.1
$region0: #{tpu_custom_call.1}
  #allocation0 [shape = 'u32[]', space=smem, size = 0x4, offset = 0x4, fixed_abs, tag = 'smem constant byte address 0x4 - core index']
  #allocation1 [shape = 'u32[144,128]{1,0:T(1,128)}', space=vmem, size = 0x12000, scoped, tag = 'internal scratch']
  %s0 = inlined_call_operand.vmem [shape: f32[8,4], index: 0, kind: input, shape index: {}]
  %s1 = inlined_call_operand.vmem [shape: f32[4,128], index: 1, kind: input, shape index: {}]
  %s2 = inlined_call_operand.vmem [shape: f32[1,128], index: 2, kind: input, shape index: {}]
  %s3 = inlined_call_operand.hbm [shape: f32[8,128], index: 3, kind: output, shape index: {}]
  %s4 = sld [smem:[#allocation0]]
  $region22: #{tpu_custom_call.1} parent=0
    _
  %s6 = ssub.s32 1, %s4
  %s7 = scalar_select 0, %s6, %s4
  $region1: #{tpu_custom_call.1} parent=0
    #allocation2 [shape = 'u8[4096]{0}', space=vmem, size = 0x1000, scoped, tag = 'output window, operand 0, single buffered']
    #allocation3 [shape = 's32[1]{0}', space=sflag, size = 0x4, scoped, tag = 'scoped memory for tpu_custom_call.1']
    %8 = vsyncpa [#allocation3], 0
    // Predicated region
    $region2: #{tpu_custom_call.1} parent=1 // pred_check
      _
    $region3: #{tpu_custom_call.1} parent=1 // pred_check_branch
      %10 = sbr.rel (0) target = $region5
    $region4: #{tpu_custom_call.1} parent=1 // pred_region
      _
    $region5: #{tpu_custom_call.1} parent=1 // pred_fallthru
      _
    // Predicated region
    $region6: #{tpu_custom_call.1} parent=1 // pred_check
      _
    $region7: #{tpu_custom_call.1} parent=1 // pred_check_branch
      %12 = sbr.rel (0) target = $region9
    $region8: #{tpu_custom_call.1} parent=1 // pred_region
      _
    $region9: #{tpu_custom_call.1} parent=1 // pred_fallthru
      _
    // Predicated region
    $region10: #{tpu_custom_call.1} parent=1 // pred_check
      _
    $region11: #{tpu_custom_call.1} parent=1 // pred_check_branch
      %14 = sbr.rel (0) target = $region13
    $region12: #{tpu_custom_call.1} parent=1 // pred_region
      _
    $region13: #{tpu_custom_call.1} parent=1 // pred_fallthru
      _
    %v15 = vld [vmem:[%s0] sm:$0xff]
    %v16 = vld [vmem:[%s1] sm:$0xf]
    %18 = vset.pattern.permute.xlu0 0
    %19 = vperm.xlu0 %18, %v15
    %v20 = vpop.permute.xlu0 %19
    %v22 = vlaneseq
    %v23 = vshrl.u32 %v22, 7
    %v24 = vsub.s32 0, %v23
    %v25 = vrot.slane %v16, %v24
    %v26 = vmul.f32 %v20, %v25
    %27 = vset.pattern.permute.xlu0 1
    %28 = vperm.xlu0 %27, %v15
    %v29 = vpop.permute.xlu0 %28
    %v31 = vlaneseq
    %v32 = vshrl.u32 %v31, 7
    %v33 = vsub.s32 1, %v32
    %v34 = vrot.slane %v16, %v33
    %v35 = vmul.f32 %v29, %v34
    %v36 = vadd.f32 %v26, %v35
    %37 = vset.pattern.permute.xlu0 2
    %38 = vperm.xlu0 %37, %v15
    %v39 = vpop.permute.xlu0 %38
    %v41 = vlaneseq
    %v42 = vshrl.u32 %v41, 7
    %v43 = vsub.s32 2, %v42
    %v44 = vrot.slane %v16, %v43
    %v45 = vmul.f32 %v39, %v44
    %v46 = vadd.f32 %v36, %v45
    %47 = vset.pattern.permute.xlu0 3
    %48 = vperm.xlu0 %47, %v15
    %v49 = vpop.permute.xlu0 %48
    %v51 = vlaneseq
    %v52 = vshrl.u32 %v51, 7
    %v53 = vsub.s32 3, %v52
    %v54 = vrot.slane %v16, %v53
    %v55 = vmul.f32 %v49, %v54
    %v56 = vadd.f32 %v46, %v55
    %v57 = vld [vmem:[%s2] sm:$0x1]
    %v59 = vlaneseq
    %v60 = vshrl.u32 %v59, 7
    %v61 = vsub.s32 0, %v60
    %v62 = vrot.slane %v57, %v61
    %v64 = vadd.f32 %v56, %v62
    %65 = vst [vmem:[#allocation2] sm:$0xff] %v64
    // Predicated region
    $region14: #{tpu_custom_call.1} parent=1 // pred_check
      _
    $region15: #{tpu_custom_call.1} parent=1 // pred_check_branch
      %67 = sbr.rel (0) target = $region17
    $region16: #{tpu_custom_call.1} parent=1 // pred_region
      %s69 = ssub.s32 128, 128
      %70 = vsyncadd [#allocation3], %s69
      %s72 = sshll.u32 [#allocation2], 4
      %s73 = int_to_ptr.vmem [resolvable:$true] %s72
      %75 = dma.vmem_to_hbm [thread:$0]  %s73, 128, %s3, [#allocation3]
    $region17: #{tpu_custom_call.1} parent=1 // pred_fallthru
      _
    // Predicated region
    $region18: #{tpu_custom_call.1} parent=1 // pred_check
      _
    $region19: #{tpu_custom_call.1} parent=1 // pred_check_branch
      %77 = sbr.rel (0) target = $region21
    $region20: #{tpu_custom_call.1} parent=1 // pred_region
      %78 = dma.done [#allocation3], 128
    $region21: #{tpu_custom_call.1} parent=1 // pred_fallthru
      _
    %79 = vsyncpa [#allocation3], 1

</llo_original>
